<compile_context>
chip_gen: v7x
topology: tpu7x:2x2x1
jax: 0.10.0
libtpu: 0.0.40
codegen_flags: <defaults>
</compile_context>

<pallas_src>
import functools

import jax
import jax.numpy as jnp
from jax.experimental import pallas as pl
from jax.experimental.pallas import tpu as pltpu


def _patch_merging_kernel(p_ref, w_ref, g_ref, b_ref, m_ref, mt_ref, o_ref,
                          *, inv_group_count, eps):
    # p_ref : (Bt, N, K)  im2col patches (K = C*kh*kw on lanes)
    # w_ref : (K, D)      reduction weight, transposed -> output D lane-dense
    # g_ref : (1, D)      GroupNorm gamma
    # b_ref : (1, D)      GroupNorm beta
    # m_ref : (D, G)      channel -> group one-hot membership
    # mt_ref: (G, D)      its transpose (precomputed, no in-kernel transpose)
    # o_ref : (Bt, N, D)
    Bt, N, K = p_ref.shape
    D = w_ref.shape[1]

    p = p_ref[...]
    w = w_ref[...]

    # Strided conv (patch reduction) == a single MXU matmul (f32 accumulate).
    y = jnp.dot(p.reshape(Bt * N, K), w,
                preferred_element_type=jnp.float32).reshape(Bt, N, D)

    m = m_ref[...]                                   # (D, G)
    mt = mt_ref[...]                                 # (G, D)

    # GroupNorm: per-(sample, group) stats over (N, channels-in-group).
    # Two-pass (mean, then centered variance); group aggregation via one-hot
    # membership matmuls keeps everything lane-dense on the MXU.
    ch_sum = jnp.sum(y, axis=1)                                           # (Bt, D)
    grp_mean = jnp.dot(ch_sum, m,
                       preferred_element_type=jnp.float32) * inv_group_count  # (Bt, G)
    mean_c = jnp.dot(grp_mean, mt,
                     preferred_element_type=jnp.float32)                  # (Bt, D)
    yc = y - mean_c[:, None, :]                                           # (Bt, N, D)
    ch_sq = jnp.sum(yc * yc, axis=1)                                      # (Bt, D)
    grp_var = jnp.dot(ch_sq, m,
                      preferred_element_type=jnp.float32) * inv_group_count   # (Bt, G)
    var_c = jnp.dot(grp_var, mt,
                    preferred_element_type=jnp.float32)                   # (Bt, D)
    inv_std = jax.lax.rsqrt(var_c + eps)                                  # (Bt, D)

    gamma = g_ref[0]                                                      # (D,)
    beta = b_ref[0]                                                       # (D,)
    # Fold gamma into the per-(sample, channel) scale before broadcasting to
    # (Bt, N, D): one fewer full-size VPU pass than scaling then re-scaling.
    scale = inv_std * gamma[None, :]                                      # (Bt, D)
    o_ref[...] = (yc * scale[:, None, :]
                  + beta[None, None, :]).astype(o_ref.dtype)


def patch_merging(x, weight, gamma, beta, *, stride, num_groups=16, eps=1e-5):
    """PatchMerging forward (Conv2d(bias=False) + GroupNorm(16, Out_dim)).

    x      : (B, C, H, W) or (B, T, C, H, W)   (smart_forward semantics)
    weight : (D, C, kh, kw)  PyTorch OIHW Conv2d weight
    gamma, beta : (D,)       GroupNorm affine params
    Returns NCHW (B, D, Ho, Wo) (or (B, T, D, Ho, Wo) for 5-D input).
    """
    if x.ndim == 5:  # TemporallySharedBlock.smart_forward: fold (b, t)
        b, t = x.shape[:2]
        out = patch_merging(x.reshape((b * t,) + x.shape[2:]), weight, gamma,
                            beta, stride=stride, num_groups=num_groups, eps=eps)
        return out.reshape((b, t) + out.shape[1:])

    B, C, H, W = x.shape
    D, Cw, kh, kw = weight.shape
    assert Cw == C
    s = int(stride)
    Ho = (H - kh) // s + 1
    Wo = (W - kw) // s + 1
    N = Ho * Wo
    K = C * kh * kw
    G = int(num_groups)
    assert D % G == 0, "GroupNorm(16, Out_dim) requires Out_dim % 16 == 0"
    cg = D // G

    # --- im2col in the wrapper (pure layout plumbing, handles any k/s, pad=0).
    # Patch feature order (C, kh, kw) matches weight.reshape(D, C*kh*kw).
    cols = []
    for ki in range(kh):
        for kj in range(kw):
            cols.append(x[:, :, ki:ki + (Ho - 1) * s + 1:s,
                             kj:kj + (Wo - 1) * s + 1:s])   # (B, C, Ho, Wo)
    p = jnp.stack(cols, axis=2).reshape(B, K, Ho, Wo)       # (B, C*kh*kw, Ho, Wo)
    p = jnp.transpose(p, (0, 2, 3, 1)).reshape(B, N, K)     # channels-last patches

    w_t = weight.reshape(D, K).T                            # (K, D)

    # channel -> group one-hot membership (and its transpose) for GroupNorm.
    ch_group = jnp.arange(D) // cg
    m = jax.nn.one_hot(ch_group, G, dtype=jnp.float32)      # (D, G)
    mt = jnp.transpose(m)                                   # (G, D)

    # --- batch several samples per grid step so each step moves ~MiB tiles
    # (per-step overhead ~0.35us; account for input+output, double-buffered).
    bytes_per_elem = x.dtype.itemsize
    per_img_bytes = (N * K + N * D) * bytes_per_elem
    target_bytes = 2 * 1024 * 1024
    bt_cap = max(1, target_bytes // max(per_img_bytes, 1))
    Bt = 1
    for d in range(1, B + 1):
        if B % d == 0 and d <= bt_cap:
            Bt = d

    kernel = functools.partial(
        _patch_merging_kernel,
        inv_group_count=1.0 / float(N * cg),
        eps=float(eps),
    )

    flops = int(2 * B * N * K * D + 10 * B * N * D)
    bytes_accessed = int(bytes_per_elem * (B * N * K + B * N * D)
                         + 4 * (K * D + 2 * D + 2 * D * G))

    out = pl.pallas_call(
        kernel,
        out_shape=jax.ShapeDtypeStruct((B, N, D), x.dtype),
        grid_spec=pltpu.PrefetchScalarGridSpec(
            num_scalar_prefetch=0,
            grid=(B // Bt,),
            in_specs=[
                pl.BlockSpec((Bt, N, K), lambda b: (b, 0, 0)),
                pl.BlockSpec((K, D), lambda b: (0, 0)),
                pl.BlockSpec((1, D), lambda b: (0, 0)),
                pl.BlockSpec((1, D), lambda b: (0, 0)),
                pl.BlockSpec((D, G), lambda b: (0, 0)),
                pl.BlockSpec((G, D), lambda b: (0, 0)),
            ],
            out_specs=pl.BlockSpec((Bt, N, D), lambda b: (b, 0, 0)),
        ),
        compiler_params=pltpu.CompilerParams(
            dimension_semantics=("parallel",),
            vmem_limit_bytes=32 * 1024 * 1024),
        cost_estimate=pl.CostEstimate(
            flops=flops,
            transcendentals=int(B * D),
            bytes_accessed=bytes_accessed),
    )(p, w_t, gamma.reshape(1, D).astype(jnp.float32),
      beta.reshape(1, D).astype(jnp.float32), m, mt)

    # back to PyTorch NCHW
    return jnp.transpose(out.reshape(B, Ho, Wo, D), (0, 3, 1, 2))


def patch_merging_ref(x, weight, gamma, beta, *, stride, num_groups=16,
                      eps=1e-5):
    """Pure-JAX reference of the PyTorch forward (Conv2d + GroupNorm)."""
    y = jax.lax.conv_general_dilated(
        x, weight, window_strides=(stride, stride), padding='VALID',
        dimension_numbers=('NCHW', 'OIHW', 'NCHW'))
    B, D, Ho, Wo = y.shape
    G = num_groups
    yg = y.reshape(B, G, D // G, Ho, Wo)
    mean = yg.mean(axis=(2, 3, 4), keepdims=True)
    var = yg.var(axis=(2, 3, 4), keepdims=True)
    yn = ((yg - mean) / jnp.sqrt(var + eps)).reshape(B, D, Ho, Wo)
    return yn * gamma[None, :, None, None] + beta[None, :, None, None]


if __name__ == "__main__":
    key = jax.random.PRNGKey(0)
    kx, kw, kg, kb = jax.random.split(key, 4)

    # small shapes consistent with the module: Out_dim must be divisible by 16
    B, In_dim, H, W = 2, 4, 16, 16
    Out_dim = 32
    patch_size2 = 2
    patch_stride2 = 2

    x = jax.random.normal(kx, (B, In_dim, H, W), dtype=jnp.float32)
    weight = 0.1 * jax.random.normal(
        kw, (Out_dim, In_dim, patch_size2, patch_size2), dtype=jnp.float32)
    gamma = 1.0 + 0.1 * jax.random.normal(kg, (Out_dim,), dtype=jnp.float32)
    beta = 0.1 * jax.random.normal(kb, (Out_dim,), dtype=jnp.float32)

    # 4-D path (plain forward)
    out = patch_merging(x, weight, gamma, beta, stride=patch_stride2)
    out = jax.block_until_ready(out)
    ref = patch_merging_ref(x, weight, gamma, beta, stride=patch_stride2)
    assert out.shape == ref.shape == (B, Out_dim, H // 2, W // 2)
    assert jnp.allclose(out, ref, atol=1e-4, rtol=1e-4)

    # 5-D path (TemporallySharedBlock.smart_forward: fold (b, t))
    T = 3
    x5 = jax.random.normal(kx, (B, T, In_dim, H, W), dtype=jnp.float32)
    out5 = jax.block_until_ready(
        patch_merging(x5, weight, gamma, beta, stride=patch_stride2))
    ref5 = patch_merging_ref(x5.reshape(B * T, In_dim, H, W), weight, gamma,
                             beta, stride=patch_stride2)
    assert out5.shape == (B, T, Out_dim, H // 2, W // 2)
    assert jnp.allclose(out5.reshape(ref5.shape), ref5, atol=1e-4, rtol=1e-4)

    print("KERNEL_OK")
</pallas_src>

<mosaic_0001>
module attributes {stable_mosaic.version = 11 : i64} {
  func.func @_patch_merging_kernel(%arg0: i32, %arg1: memref<2x64x16xf32, #tpu.memory_space<vmem>>, %arg2: memref<16x32xf32, #tpu.memory_space<vmem>>, %arg3: memref<1x32xf32, #tpu.memory_space<vmem>>, %arg4: memref<1x32xf32, #tpu.memory_space<vmem>>, %arg5: memref<32x16xf32, #tpu.memory_space<vmem>>, %arg6: memref<16x32xf32, #tpu.memory_space<vmem>>, %arg7: memref<2x64x32xf32, #tpu.memory_space<vmem>>) attributes {dimension_semantics = [#tpu.dimension_semantics<parallel>], iteration_bounds = array<i64: 1>, scalar_prefetch = 0 : i64, scratch_operands = 0 : i64, tpu.core_type = #tpu.core_type<tc>, window_params = [{transform_indices = @transform_0, window_bounds = array<i64: 2, 64, 16>}, {pipeline_mode = #tpu.pipeline_mode<synchronous>, transform_indices = @transform_1, window_bounds = array<i64: 16, 32>}, {pipeline_mode = #tpu.pipeline_mode<synchronous>, transform_indices = @transform_2, window_bounds = array<i64: 1, 32>}, {pipeline_mode = #tpu.pipeline_mode<synchronous>, transform_indices = @transform_3, window_bounds = array<i64: 1, 32>}, {pipeline_mode = #tpu.pipeline_mode<synchronous>, transform_indices = @transform_4, window_bounds = array<i64: 32, 16>}, {pipeline_mode = #tpu.pipeline_mode<synchronous>, transform_indices = @transform_5, window_bounds = array<i64: 16, 32>}, {transform_indices = @transform_6, window_bounds = array<i64: 2, 64, 32>}]} {
    %c0 = arith.constant 0 : index
    %c0_0 = arith.constant 0 : index
    %c0_1 = arith.constant 0 : index
    %0 = vector.load %arg1[%c0, %c0_0, %c0_1] : memref<2x64x16xf32, #tpu.memory_space<vmem>>, vector<2x64x16xf32>
    %c0_2 = arith.constant 0 : index
    %c0_3 = arith.constant 0 : index
    %1 = vector.load %arg2[%c0_2, %c0_3] : memref<16x32xf32, #tpu.memory_space<vmem>>, vector<16x32xf32>
    %2 = vector.shape_cast %0 : vector<2x64x16xf32> to vector<128x16xf32>
    %cst = arith.constant dense<0.000000e+00> : vector<128x32xf32>
    %3 = tpu.matmul %2, %1, %cst {dimension_numbers = #tpu.dot_dimension_numbers<[1], [0], [0], [1], [0, 0, 1, 1], [], []>} : vector<128x16xf32>, vector<16x32xf32>, vector<128x32xf32> -> vector<128x32xf32>
    %4 = vector.shape_cast %3 : vector<128x32xf32> to vector<2x64x32xf32>
    %c0_4 = arith.constant 0 : index
    %c0_5 = arith.constant 0 : index
    %5 = vector.load %arg5[%c0_4, %c0_5] : memref<32x16xf32, #tpu.memory_space<vmem>>, vector<32x16xf32>
    %c0_6 = arith.constant 0 : index
    %c0_7 = arith.constant 0 : index
    %6 = vector.load %arg6[%c0_6, %c0_7] : memref<16x32xf32, #tpu.memory_space<vmem>>, vector<16x32xf32>
    %cst_8 = arith.constant dense<0.000000e+00> : vector<2x32xf32>
    %7 = vector.multi_reduction <add>, %4, %cst_8 [1] : vector<2x64x32xf32> to vector<2x32xf32>
    %cst_9 = arith.constant dense<0.000000e+00> : vector<2x16xf32>
    %8 = tpu.matmul %7, %5, %cst_9 {dimension_numbers = #tpu.dot_dimension_numbers<[1], [0], [0], [1], [0, 0, 1, 1], [], []>} : vector<2x32xf32>, vector<32x16xf32>, vector<2x16xf32> -> vector<2x16xf32>
    %cst_10 = arith.constant 7.812500e-03 : f32
    %9 = vector.broadcast %cst_10 : f32 to vector<2x16xf32>
    %10 = arith.mulf %8, %9 : vector<2x16xf32>
    %cst_11 = arith.constant dense<0.000000e+00> : vector<2x32xf32>
    %11 = tpu.matmul %10, %6, %cst_11 {dimension_numbers = #tpu.dot_dimension_numbers<[1], [0], [0], [1], [0, 0, 1, 1], [], []>} : vector<2x16xf32>, vector<16x32xf32>, vector<2x32xf32> -> vector<2x32xf32>
    %12 = vector.shape_cast %11 : vector<2x32xf32> to vector<2x1x32xf32>
    %13 = vector.broadcast %12 : vector<2x1x32xf32> to vector<2x64x32xf32>
    %14 = arith.subf %4, %13 : vector<2x64x32xf32>
    %15 = arith.mulf %14, %14 : vector<2x64x32xf32>
    %cst_12 = arith.constant dense<0.000000e+00> : vector<2x32xf32>
    %16 = vector.multi_reduction <add>, %15, %cst_12 [1] : vector<2x64x32xf32> to vector<2x32xf32>
    %cst_13 = arith.constant dense<0.000000e+00> : vector<2x16xf32>
    %17 = tpu.matmul %16, %5, %cst_13 {dimension_numbers = #tpu.dot_dimension_numbers<[1], [0], [0], [1], [0, 0, 1, 1], [], []>} : vector<2x32xf32>, vector<32x16xf32>, vector<2x16xf32> -> vector<2x16xf32>
    %cst_14 = arith.constant 7.812500e-03 : f32
    %18 = vector.broadcast %cst_14 : f32 to vector<2x16xf32>
    %19 = arith.mulf %17, %18 : vector<2x16xf32>
    %cst_15 = arith.constant dense<0.000000e+00> : vector<2x32xf32>
    %20 = tpu.matmul %19, %6, %cst_15 {dimension_numbers = #tpu.dot_dimension_numbers<[1], [0], [0], [1], [0, 0, 1, 1], [], []>} : vector<2x16xf32>, vector<16x32xf32>, vector<2x32xf32> -> vector<2x32xf32>
    %cst_16 = arith.constant 9.99999974E-6 : f32
    %21 = vector.broadcast %cst_16 : f32 to vector<2x32xf32>
    %22 = arith.addf %20, %21 : vector<2x32xf32>
    %23 = math.rsqrt %22 : vector<2x32xf32>
    %c0_17 = arith.constant 0 : index
    %c0_18 = arith.constant 0 : index
    %24 = vector.load %arg3[%c0_17, %c0_18] : memref<1x32xf32, #tpu.memory_space<vmem>>, vector<1x32xf32>
    %25 = vector.shape_cast %24 : vector<1x32xf32> to vector<32xf32>
    %c0_19 = arith.constant 0 : index
    %c0_20 = arith.constant 0 : index
    %26 = vector.load %arg4[%c0_19, %c0_20] : memref<1x32xf32, #tpu.memory_space<vmem>>, vector<1x32xf32>
    %27 = vector.shape_cast %26 : vector<1x32xf32> to vector<32xf32>
    %28 = vector.shape_cast %25 : vector<32xf32> to vector<1x32xf32>
    %29 = vector.broadcast %28 : vector<1x32xf32> to vector<2x32xf32>
    %30 = arith.mulf %23, %29 : vector<2x32xf32>
    %31 = vector.shape_cast %30 : vector<2x32xf32> to vector<2x1x32xf32>
    %32 = vector.broadcast %31 : vector<2x1x32xf32> to vector<2x64x32xf32>
    %33 = arith.mulf %14, %32 : vector<2x64x32xf32>
    %34 = vector.shape_cast %27 : vector<32xf32> to vector<1x1x32xf32>
    %35 = vector.broadcast %34 : vector<1x1x32xf32> to vector<2x64x32xf32>
    %36 = arith.addf %33, %35 : vector<2x64x32xf32>
    %c0_21 = arith.constant 0 : index
    %c0_22 = arith.constant 0 : index
    %c0_23 = arith.constant 0 : index
    %37 = vector.load %arg7[%c0_21, %c0_22, %c0_23] : memref<2x64x32xf32, #tpu.memory_space<vmem>>, vector<2x64x32xf32>
    tpu.vector_store %arg7[%c0_21, %c0_22, %c0_23], %36 {strides = array<i32>} : memref<2x64x32xf32, #tpu.memory_space<vmem>>, vector<2x64x32xf32>,
    return
  }
  func.func @transform_0(%arg0: i32) -> (i32, i32, i32) {
    %c0_i32 = arith.constant 0 : i32
    %c0_i32_0 = arith.constant 0 : i32
    %c0_i32_1 = arith.constant 0 : i32
    return %arg0, %c0_i32, %c0_i32_0 : i32, i32, i32
  }
  func.func @transform_1(%arg0: i32) -> (i32, i32) {
    %c0_i32 = arith.constant 0 : i32
    %c0_i32_0 = arith.constant 0 : i32
    %c0_i32_1 = arith.constant 0 : i32
    return %c0_i32, %c0_i32_0 : i32, i32
  }
  func.func @transform_2(%arg0: i32) -> (i32, i32) {
    %c0_i32 = arith.constant 0 : i32
    %c0_i32_0 = arith.constant 0 : i32
    %c0_i32_1 = arith.constant 0 : i32
    return %c0_i32, %c0_i32_0 : i32, i32
  }
  func.func @transform_3(%arg0: i32) -> (i32, i32) {
    %c0_i32 = arith.constant 0 : i32
    %c0_i32_0 = arith.constant 0 : i32
    %c0_i32_1 = arith.constant 0 : i32
    return %c0_i32, %c0_i32_0 : i32, i32
  }
  func.func @transform_4(%arg0: i32) -> (i32, i32) {
    %c0_i32 = arith.constant 0 : i32
    %c0_i32_0 = arith.constant 0 : i32
    %c0_i32_1 = arith.constant 0 : i32
    return %c0_i32, %c0_i32_0 : i32, i32
  }
  func.func @transform_5(%arg0: i32) -> (i32, i32) {
    %c0_i32 = arith.constant 0 : i32
    %c0_i32_0 = arith.constant 0 : i32
    %c0_i32_1 = arith.constant 0 : i32
    return %c0_i32, %c0_i32_0 : i32, i32
  }
  func.func @transform_6(%arg0: i32) -> (i32, i32, i32) {
    %c0_i32 = arith.constant 0 : i32
    %c0_i32_0 = arith.constant 0 : i32
    %c0_i32_1 = arith.constant 0 : i32
    return %arg0, %c0_i32, %c0_i32_0 : i32, i32, i32
  }
}

</mosaic_0001>

<llo_original>
// kernel: tpu_custom_call.1
$region0: #{tpu_custom_call.1}
  #allocation0 [shape = 'u32[]', space=smem, size = 0x4, offset = 0x4, fixed_abs, tag = 'smem constant byte address 0x4 - core index']
  #allocation1 [shape = 'u32[144,128]{1,0:T(1,128)}', space=vmem, size = 0x12000, scoped, tag = 'internal scratch']
  %s0 = inlined_call_operand.vmem [shape: f32[2,64,16], index: 0, kind: input, shape index: {}]
  %s1 = inlined_call_operand.vmem [shape: f32[16,32], index: 1, kind: input, shape index: {}]
  %s2 = inlined_call_operand.vmem [shape: f32[1,32], index: 2, kind: input, shape index: {}]
  %s3 = inlined_call_operand.vmem [shape: f32[1,32], index: 3, kind: input, shape index: {}]
  %s4 = inlined_call_operand.vmem [shape: f32[32,16], index: 4, kind: input, shape index: {}]
  %s5 = inlined_call_operand.vmem [shape: f32[16,32], index: 5, kind: input, shape index: {}]
  %s6 = inlined_call_operand.vmem [shape: f32[2,64,32], index: 6, kind: output, shape index: {}]
  %s7 = sld [smem:[#allocation0]]
  $region34: #{tpu_custom_call.1} parent=0
    _
  %s9 = ssub.s32 1, %s7
  %s10 = scalar_select 0, %s9, %s7
  // Predicated region
  $region2: #{tpu_custom_call.1} parent=0 // pred_check
    _
  $region3: #{tpu_custom_call.1} parent=0 // pred_check_branch
    %12 = sbr.rel (0) target = $region5
  $region4: #{tpu_custom_call.1} parent=0 // pred_region
    _
  $region5: #{tpu_custom_call.1} parent=0 // pred_fallthru
    _
  // Predicated region
  $region6: #{tpu_custom_call.1} parent=0 // pred_check
    _
  $region7: #{tpu_custom_call.1} parent=0 // pred_check_branch
    %14 = sbr.rel (0) target = $region9
  $region8: #{tpu_custom_call.1} parent=0 // pred_region
    _
  $region9: #{tpu_custom_call.1} parent=0 // pred_fallthru
    _
  // Predicated region
  $region10: #{tpu_custom_call.1} parent=0 // pred_check
    _
  $region11: #{tpu_custom_call.1} parent=0 // pred_check_branch
    %16 = sbr.rel (0) target = $region13
  $region12: #{tpu_custom_call.1} parent=0 // pred_region
    _
  $region13: #{tpu_custom_call.1} parent=0 // pred_fallthru
    _
  // Predicated region
  $region14: #{tpu_custom_call.1} parent=0 // pred_check
    _
  $region15: #{tpu_custom_call.1} parent=0 // pred_check_branch
    %18 = sbr.rel (0) target = $region17
  $region16: #{tpu_custom_call.1} parent=0 // pred_region
    _
  $region17: #{tpu_custom_call.1} parent=0 // pred_fallthru
    _
  // Predicated region
  $region18: #{tpu_custom_call.1} parent=0 // pred_check
    _
  $region19: #{tpu_custom_call.1} parent=0 // pred_check_branch
    %20 = sbr.rel (0) target = $region21
  $region20: #{tpu_custom_call.1} parent=0 // pred_region
    _
  $region21: #{tpu_custom_call.1} parent=0 // pred_fallthru
    _
  // Predicated region
  $region22: #{tpu_custom_call.1} parent=0 // pred_check
    _
  $region23: #{tpu_custom_call.1} parent=0 // pred_check_branch
    %22 = sbr.rel (0) target = $region25
  $region24: #{tpu_custom_call.1} parent=0 // pred_region
    _
  $region25: #{tpu_custom_call.1} parent=0 // pred_fallthru
    _
  %v23 = vld [vmem:[%s0] sm:$0xff]
  %v24 = vld [vmem:[%s0 + $0x8] sm:$0xff]
  %v25 = vld [vmem:[%s0 + $0x10] sm:$0xff]
  %v26 = vld [vmem:[%s0 + $0x18] sm:$0xff]
  %v27 = vld [vmem:[%s0 + $0x20] sm:$0xff]
  %v28 = vld [vmem:[%s0 + $0x28] sm:$0xff]
  %v29 = vld [vmem:[%s0 + $0x30] sm:$0xff]
  %v30 = vld [vmem:[%s0 + $0x38] sm:$0xff]
  %v31 = vld [vmem:[%s0 + $0x40] sm:$0xff]
  %v32 = vld [vmem:[%s0 + $0x48] sm:$0xff]
  %v33 = vld [vmem:[%s0 + $0x50] sm:$0xff]
  %v34 = vld [vmem:[%s0 + $0x58] sm:$0xff]
  %v35 = vld [vmem:[%s0 + $0x60] sm:$0xff]
  %v36 = vld [vmem:[%s0 + $0x68] sm:$0xff]
  %v37 = vld [vmem:[%s0 + $0x70] sm:$0xff]
  %v38 = vld [vmem:[%s0 + $0x78] sm:$0xff]
  %v39 = vld [vmem:[%s1] sm:$0xff]
  %v40 = vld [vmem:[%s1 + $0x8] sm:$0xff]
  %vm41 = vcmask 130048
  %v43 = vsel %vm41, %v23, 0
  %v46 = vsel %vm41, %v24, 0
  %v49 = vsel %vm41, %v25, 0
  %v52 = vsel %vm41, %v26, 0
  %v55 = vsel %vm41, %v27, 0
  %v58 = vsel %vm41, %v28, 0
  %v61 = vsel %vm41, %v29, 0
  %v64 = vsel %vm41, %v30, 0
  %v67 = vsel %vm41, %v31, 0
  %v70 = vsel %vm41, %v32, 0
  %v73 = vsel %vm41, %v33, 0
  %v76 = vsel %vm41, %v34, 0
  %v79 = vsel %vm41, %v35, 0
  %v82 = vsel %vm41, %v36, 0
  %v85 = vsel %vm41, %v37, 0
  %v88 = vsel %vm41, %v38, 0
  %90 = vmatprep.subr.mxu0 0.0
  %91 = vmatpush1.msra.mxu0 %v39
  %92 = vmatprep.subr.mxu0 0.0
  %93 = vmatpush1.msra.mxu0 %v40
  %94 = vmatprep.subr.mxu0 0.0
  %95 = vmatpush1.msra.mxu0 0.0
  %96 = vmatprep.subr.mxu0 0.0
  %97 = vmatpush1.msra.mxu0 0.0
  %98 = vmatprep.subr.mxu0 0.0
  %99 = vmatpush1.msra.mxu0 0.0
  %100 = vmatprep.subr.mxu0 0.0
  %101 = vmatpush1.msra.mxu0 0.0
  %102 = vmatprep.subr.mxu0 0.0
  %103 = vmatpush1.msra.mxu0 0.0
  %104 = vmatprep.subr.mxu0 0.0
  %105 = vmatpush1.msra.mxu0 0.0
  %106 = vmatprep.subr.mxu0 0.0
  %107 = vmatpush1.msra.mxu0 0.0
  %108 = vmatprep.subr.mxu0 0.0
  %109 = vmatpush1.msra.mxu0 0.0
  %110 = vmatprep.subr.mxu0 0.0
  %111 = vmatpush1.msra.mxu0 0.0
  %112 = vmatprep.subr.mxu0 0.0
  %113 = vmatpush1.msra.mxu0 0.0
  %114 = vmatprep.subr.mxu0 0.0
  %115 = vmatpush1.msra.mxu0 0.0
  %116 = vmatprep.subr.mxu0 0.0
  %117 = vmatpush1.msra.mxu0 0.0
  %118 = vmatprep.subr.mxu0 0.0
  %119 = vmatpush1.msra.mxu0 0.0
  %120 = vmatprep.subr.mxu0 0.0
  %121 = vmatpush1.msra.mxu0 0.0
  %122 = vmatprep.subr.mxu0 0.0
  %123 = vmatpush1.msra.mxu0 0.0
  %124 = vmatprep.subr.mxu0 0.0
  %125 = vmatpush1.msra.mxu0 0.0
  %126 = vmatprep.subr.mxu0 0.0
  %127 = vmatpush1.msra.mxu0 0.0
  %128 = vmatprep.subr.mxu0 0.0
  %129 = vmatpush1.msra.mxu0 0.0
  %130 = vmatprep.subr.mxu0 0.0
  %131 = vmatpush1.msra.mxu0 0.0
  %132 = vmatprep.subr.mxu0 0.0
  %133 = vmatpush1.msra.mxu0 0.0
  %134 = vmatprep.subr.mxu0 0.0
  %135 = vmatpush1.msra.mxu0 0.0
  %136 = vmatprep.subr.mxu0 0.0
  %137 = vmatpush1.msra.mxu0 0.0
  %138 = vmatprep.subr.mxu0 0.0
  %139 = vmatpush1.msra.mxu0 0.0
  %140 = vmatprep.subr.mxu0 0.0
  %141 = vmatpush1.msra.mxu0 0.0
  %142 = vmatprep.subr.mxu0 0.0
  %143 = vmatpush1.msra.mxu0 0.0
  %144 = vmatprep.subr.mxu0 0.0
  %145 = vmatpush1.msra.mxu0 0.0
  %146 = vmatprep.subr.mxu0 0.0
  %147 = vmatpush1.msra.mxu0 0.0
  %148 = vmatprep.subr.mxu0 0.0
  %149 = vmatpush1.msra.mxu0 0.0
  %150 = vmatprep.subr.mxu0 0.0
  %151 = vmatpush1.msra.mxu0 0.0
  %152 = vmatprep.subr.mxu0 0.0
  %153 = vmatpush1.msra.mxu0 0.0
  %154 = vmatprep.mubr.f32.mxu0 0.0
  %155 = vmatmul.mubr.f32.gmra.mrb[0].mxu0 %v43
  %v156 = vpop.f32.mrb[0].mxu0
  %v157 = vadd.f32 0.0, %v156
  %v158 = vpop.f32.mrb[0].mxu0
  %159 = vmatprep.mubr.f32.mxu0 0.0
  %160 = vmatmul.mubr.f32.gmra.mrb[0].mxu0 %v46
  %v161 = vpop.f32.mrb[0].mxu0
  %v162 = vadd.f32 0.0, %v161
  %v163 = vpop.f32.mrb[0].mxu0
  %164 = vmatprep.mubr.f32.mxu0 0.0
  %165 = vmatmul.mubr.f32.gmra.mrb[0].mxu0 %v49
  %v166 = vpop.f32.mrb[0].mxu0
  %v167 = vadd.f32 0.0, %v166
  %v168 = vpop.f32.mrb[0].mxu0
  %169 = vmatprep.mubr.f32.mxu0 0.0
  %170 = vmatmul.mubr.f32.gmra.mrb[0].mxu0 %v52
  %v171 = vpop.f32.mrb[0].mxu0
  %v172 = vadd.f32 0.0, %v171
  %v173 = vpop.f32.mrb[0].mxu0
  %174 = vmatprep.mubr.f32.mxu0 0.0
  %175 = vmatmul.mubr.f32.gmra.mrb[0].mxu0 %v55
  %v176 = vpop.f32.mrb[0].mxu0
  %v177 = vadd.f32 0.0, %v176
  %v178 = vpop.f32.mrb[0].mxu0
  %179 = vmatprep.mubr.f32.mxu0 0.0
  %180 = vmatmul.mubr.f32.gmra.mrb[0].mxu0 %v58
  %v181 = vpop.f32.mrb[0].mxu0
  %v182 = vadd.f32 0.0, %v181
  %v183 = vpop.f32.mrb[0].mxu0
  %184 = vmatprep.mubr.f32.mxu0 0.0
  %185 = vmatmul.mubr.f32.gmra.mrb[0].mxu0 %v61
  %v186 = vpop.f32.mrb[0].mxu0
  %v187 = vadd.f32 0.0, %v186
  %v188 = vpop.f32.mrb[0].mxu0
  %189 = vmatprep.mubr.f32.mxu0 0.0
  %190 = vmatmul.mubr.f32.gmra.mrb[0].mxu0 %v64
  %v191 = vpop.f32.mrb[0].mxu0
  %v192 = vadd.f32 0.0, %v191
  %v193 = vpop.f32.mrb[0].mxu0
  %194 = vmatprep.mubr.f32.mxu0 0.0
  %195 = vmatmul.mubr.f32.gmra.mrb[0].mxu0 %v67
  %v196 = vpop.f32.mrb[0].mxu0
  %v197 = vadd.f32 0.0, %v196
  %v198 = vpop.f32.mrb[0].mxu0
  %199 = vmatprep.mubr.f32.mxu0 0.0
  %200 = vmatmul.mubr.f32.gmra.mrb[0].mxu0 %v70
  %v201 = vpop.f32.mrb[0].mxu0
  %v202 = vadd.f32 0.0, %v201
  %v203 = vpop.f32.mrb[0].mxu0
  %204 = vmatprep.mubr.f32.mxu0 0.0
  %205 = vmatmul.mubr.f32.gmra.mrb[0].mxu0 %v73
  %v206 = vpop.f32.mrb[0].mxu0
  %v207 = vadd.f32 0.0, %v206
  %v208 = vpop.f32.mrb[0].mxu0
  %209 = vmatprep.mubr.f32.mxu0 0.0
  %210 = vmatmul.mubr.f32.gmra.mrb[0].mxu0 %v76
  %v211 = vpop.f32.mrb[0].mxu0
  %v212 = vadd.f32 0.0, %v211
  %v213 = vpop.f32.mrb[0].mxu0
  %214 = vmatprep.mubr.f32.mxu0 0.0
  %215 = vmatmul.mubr.f32.gmra.mrb[0].mxu0 %v79
  %v216 = vpop.f32.mrb[0].mxu0
  %v217 = vadd.f32 0.0, %v216
  %v218 = vpop.f32.mrb[0].mxu0
  %219 = vmatprep.mubr.f32.mxu0 0.0
  %220 = vmatmul.mubr.f32.gmra.mrb[0].mxu0 %v82
  %v221 = vpop.f32.mrb[0].mxu0
  %v222 = vadd.f32 0.0, %v221
  %v223 = vpop.f32.mrb[0].mxu0
  %224 = vmatprep.mubr.f32.mxu0 0.0
  %225 = vmatmul.mubr.f32.gmra.mrb[0].mxu0 %v85
  %v226 = vpop.f32.mrb[0].mxu0
  %v227 = vadd.f32 0.0, %v226
  %v228 = vpop.f32.mrb[0].mxu0
  %229 = vmatprep.mubr.f32.mxu0 0.0
  %230 = vmatmul.mubr.f32.gmra.mrb[0].mxu0 %v88
  %v231 = vpop.f32.mrb[0].mxu0
  %v232 = vadd.f32 0.0, %v231
  %v233 = vpop.f32.mrb[0].mxu0
  %234 = vdwg.mxu0
  %v235 = vld [vmem:[%s4] sm:$0xff]
  %v236 = vld [vmem:[%s4 + $0x8] sm:$0xff]
  %v237 = vld [vmem:[%s4 + $0x10] sm:$0xff]
  %v238 = vld [vmem:[%s4 + $0x18] sm:$0xff]
  %v239 = vld [vmem:[%s5] sm:$0xff]
  %v240 = vld [vmem:[%s5 + $0x8] sm:$0xff]
  %vm241 = vcmask 261120
  %v242 = vsel %vm241, %v157, 0.0
  %v243 = vsel %vm241, %v162, 0.0
  %v244 = vadd.f32 %v242, %v243
  %v245 = vsel %vm241, %v167, 0.0
  %v246 = vadd.f32 %v244, %v245
  %v247 = vsel %vm241, %v172, 0.0
  %v248 = vadd.f32 %v246, %v247
  %v249 = vsel %vm241, %v177, 0.0
  %v250 = vadd.f32 %v248, %v249
  %v251 = vsel %vm241, %v182, 0.0
  %v252 = vadd.f32 %v250, %v251
  %v253 = vsel %vm241, %v187, 0.0
  %v254 = vadd.f32 %v252, %v253
  %v255 = vsel %vm241, %v192, 0.0
  %v256 = vadd.f32 %v254, %v255
  %v257 = vrot.slane %v256, 4
  %v258 = vadd.f32 %v256, %v257
  %v259 = vrot.slane %v258, 2
  %v260 = vadd.f32 %v258, %v259
  %v261 = vrot.slane %v260, 1
  %v262 = vadd.f32 %v260, %v261
  %v263 = vsel %vm241, %v197, 0.0
  %v264 = vsel %vm241, %v202, 0.0
  %v265 = vadd.f32 %v263, %v264
  %v266 = vsel %vm241, %v207, 0.0
  %v267 = vadd.f32 %v265, %v266
  %v268 = vsel %vm241, %v212, 0.0
  %v269 = vadd.f32 %v267, %v268
  %v270 = vsel %vm241, %v217, 0.0
  %v271 = vadd.f32 %v269, %v270
  %v272 = vsel %vm241, %v222, 0.0
  %v273 = vadd.f32 %v271, %v272
  %v274 = vsel %vm241, %v227, 0.0
  %v275 = vadd.f32 %v273, %v274
  %v276 = vsel %vm241, %v232, 0.0
  %v277 = vadd.f32 %v275, %v276
  %v278 = vrot.slane %v277, 4
  %v279 = vadd.f32 %v277, %v278
  %v280 = vrot.slane %v279, 2
  %v281 = vadd.f32 %v279, %v280
  %v282 = vrot.slane %v281, 1
  %v283 = vadd.f32 %v281, %v282
  %vm286 = vcmask 1041409
  %v287 = vsel %vm286, %v283, %v262
  %v288 = vsel %vm241, %v287, 0
  %290 = vmatprep.subr.mxu0 0.0
  %291 = vmatpush1.msra.mxu0 %v235
  %292 = vmatprep.subr.mxu0 0.0
  %293 = vmatpush1.msra.mxu0 %v236
  %294 = vmatprep.subr.mxu0 0.0
  %295 = vmatpush1.msra.mxu0 %v237
  %296 = vmatprep.subr.mxu0 0.0
  %297 = vmatpush1.msra.mxu0 %v238
  %298 = vmatprep.subr.mxu0 0.0
  %299 = vmatpush1.msra.mxu0 0.0
  %300 = vmatprep.subr.mxu0 0.0
  %301 = vmatpush1.msra.mxu0 0.0
  %302 = vmatprep.subr.mxu0 0.0
  %303 = vmatpush1.msra.mxu0 0.0
  %304 = vmatprep.subr.mxu0 0.0
  %305 = vmatpush1.msra.mxu0 0.0
  %306 = vmatprep.subr.mxu0 0.0
  %307 = vmatpush1.msra.mxu0 0.0
  %308 = vmatprep.subr.mxu0 0.0
  %309 = vmatpush1.msra.mxu0 0.0
  %310 = vmatprep.subr.mxu0 0.0
  %311 = vmatpush1.msra.mxu0 0.0
  %312 = vmatprep.subr.mxu0 0.0
  %313 = vmatpush1.msra.mxu0 0.0
  %314 = vmatprep.subr.mxu0 0.0
  %315 = vmatpush1.msra.mxu0 0.0
  %316 = vmatprep.subr.mxu0 0.0
  %317 = vmatpush1.msra.mxu0 0.0
  %318 = vmatprep.subr.mxu0 0.0
  %319 = vmatpush1.msra.mxu0 0.0
  %320 = vmatprep.subr.mxu0 0.0
  %321 = vmatpush1.msra.mxu0 0.0
  %322 = vmatprep.subr.mxu0 0.0
  %323 = vmatpush1.msra.mxu0 0.0
  %324 = vmatprep.subr.mxu0 0.0
  %325 = vmatpush1.msra.mxu0 0.0
  %326 = vmatprep.subr.mxu0 0.0
  %327 = vmatpush1.msra.mxu0 0.0
  %328 = vmatprep.subr.mxu0 0.0
  %329 = vmatpush1.msra.mxu0 0.0
  %330 = vmatprep.subr.mxu0 0.0
  %331 = vmatpush1.msra.mxu0 0.0
  %332 = vmatprep.subr.mxu0 0.0
  %333 = vmatpush1.msra.mxu0 0.0
  %334 = vmatprep.subr.mxu0 0.0
  %335 = vmatpush1.msra.mxu0 0.0
  %336 = vmatprep.subr.mxu0 0.0
  %337 = vmatpush1.msra.mxu0 0.0
  %338 = vmatprep.subr.mxu0 0.0
  %339 = vmatpush1.msra.mxu0 0.0
  %340 = vmatprep.subr.mxu0 0.0
  %341 = vmatpush1.msra.mxu0 0.0
  %342 = vmatprep.subr.mxu0 0.0
  %343 = vmatpush1.msra.mxu0 0.0
  %344 = vmatprep.subr.mxu0 0.0
  %345 = vmatpush1.msra.mxu0 0.0
  %346 = vmatprep.subr.mxu0 0.0
  %347 = vmatpush1.msra.mxu0 0.0
  %348 = vmatprep.subr.mxu0 0.0
  %349 = vmatpush1.msra.mxu0 0.0
  %350 = vmatprep.subr.mxu0 0.0
  %351 = vmatpush1.msra.mxu0 0.0
  %352 = vmatprep.subr.mxu0 0.0
  %353 = vmatpush1.msra.mxu0 0.0
  %354 = vmatprep.mubr.f32.mxu0 0.0
  %355 = vmatmul.mubr.f32.gmra.mrb[0].mxu0 %v288
  %v356 = vpop.f32.mrb[0].mxu0
  %v357 = vadd.f32 0.0, %v356
  %v358 = vpop.f32.mrb[0].mxu0
  %359 = vdwg.mxu0
  %v360 = vmul.f32 %v357, 0.0078125
  %v362 = vsel %vm41, %v360, 0
  %364 = vmatprep.subr.mxu0 0.0
  %365 = vmatpush1.msra.mxu0 %v239
  %366 = vmatprep.subr.mxu0 0.0
  %367 = vmatpush1.msra.mxu0 %v240
  %368 = vmatprep.subr.mxu0 0.0
  %369 = vmatpush1.msra.mxu0 0.0
  %370 = vmatprep.subr.mxu0 0.0
  %371 = vmatpush1.msra.mxu0 0.0
  %372 = vmatprep.subr.mxu0 0.0
  %373 = vmatpush1.msra.mxu0 0.0
  %374 = vmatprep.subr.mxu0 0.0
  %375 = vmatpush1.msra.mxu0 0.0
  %376 = vmatprep.subr.mxu0 0.0
  %377 = vmatpush1.msra.mxu0 0.0
  %378 = vmatprep.subr.mxu0 0.0
  %379 = vmatpush1.msra.mxu0 0.0
  %380 = vmatprep.subr.mxu0 0.0
  %381 = vmatpush1.msra.mxu0 0.0
  %382 = vmatprep.subr.mxu0 0.0
  %383 = vmatpush1.msra.mxu0 0.0
  %384 = vmatprep.subr.mxu0 0.0
  %385 = vmatpush1.msra.mxu0 0.0
  %386 = vmatprep.subr.mxu0 0.0
  %387 = vmatpush1.msra.mxu0 0.0
  %388 = vmatprep.subr.mxu0 0.0
  %389 = vmatpush1.msra.mxu0 0.0
  %390 = vmatprep.subr.mxu0 0.0
  %391 = vmatpush1.msra.mxu0 0.0
  %392 = vmatprep.subr.mxu0 0.0
  %393 = vmatpush1.msra.mxu0 0.0
  %394 = vmatprep.subr.mxu0 0.0
  %395 = vmatpush1.msra.mxu0 0.0
  %396 = vmatprep.subr.mxu0 0.0
  %397 = vmatpush1.msra.mxu0 0.0
  %398 = vmatprep.subr.mxu0 0.0
  %399 = vmatpush1.msra.mxu0 0.0
  %400 = vmatprep.subr.mxu0 0.0
  %401 = vmatpush1.msra.mxu0 0.0
  %402 = vmatprep.subr.mxu0 0.0
  %403 = vmatpush1.msra.mxu0 0.0
  %404 = vmatprep.subr.mxu0 0.0
  %405 = vmatpush1.msra.mxu0 0.0
  %406 = vmatprep.subr.mxu0 0.0
  %407 = vmatpush1.msra.mxu0 0.0
  %408 = vmatprep.subr.mxu0 0.0
  %409 = vmatpush1.msra.mxu0 0.0
  %410 = vmatprep.subr.mxu0 0.0
  %411 = vmatpush1.msra.mxu0 0.0
  %412 = vmatprep.subr.mxu0 0.0
  %413 = vmatpush1.msra.mxu0 0.0
  %414 = vmatprep.subr.mxu0 0.0
  %415 = vmatpush1.msra.mxu0 0.0
  %416 = vmatprep.subr.mxu0 0.0
  %417 = vmatpush1.msra.mxu0 0.0
  %418 = vmatprep.subr.mxu0 0.0
  %419 = vmatpush1.msra.mxu0 0.0
  %420 = vmatprep.subr.mxu0 0.0
  %421 = vmatpush1.msra.mxu0 0.0
  %422 = vmatprep.subr.mxu0 0.0
  %423 = vmatpush1.msra.mxu0 0.0
  %424 = vmatprep.subr.mxu0 0.0
  %425 = vmatpush1.msra.mxu0 0.0
  %426 = vmatprep.subr.mxu0 0.0
  %427 = vmatpush1.msra.mxu0 0.0
  %428 = vmatprep.mubr.f32.mxu0 0.0
  %429 = vmatmul.mubr.f32.gmra.mrb[0].mxu0 %v362
  %v430 = vpop.f32.mrb[0].mxu0
  %v431 = vadd.f32 0.0, %v430
  %v432 = vpop.f32.mrb[0].mxu0
  %433 = vdwg.mxu0
  %v436 = vunpack.c.l.s4 1966171168
  %v437 = vunpack.c.0.s8 %v436
  %v438 = vlaneseq
  %v439 = vshrl.u32 %v438, 7
  %v440 = vsub.s32 %v437, %v439
  %v441 = vrot.slane %v431, %v440
  %v442 = vcombine.high %v441, %v441
  %v444 = vunpack.c.l.s4 1966171168
  %v445 = vunpack.c.0.s8 %v444
  %v446 = vlaneseq
  %v447 = vshrl.u32 %v446, 7
  %v448 = vsub.s32 %v445, %v447
  %v449 = vrot.slane %v441, %v448
  %v451 = vunpack.c.l.s4 1966171168
  %v452 = vunpack.c.0.s8 %v451
  %v453 = vlaneseq
  %v454 = vshrl.u32 %v453, 7
  %v455 = vsub.s32 %v452, %v454
  %v456 = vrot.slane %v442, %v455
  %v457 = vlaneseq
  %v458 = vshrl.u32 %v457, 7
  %v459 = vsub.s32 0, %v458
  %v460 = vrot.slane %v449, %v459
  %v461 = vlaneseq
  %v462 = vshrl.u32 %v461, 7
  %v463 = vsub.s32 0, %v462
  %v464 = vrot.slane %v456, %v463
  %v467 = vsub.f32 %v157, %v460
  %v468 = vsub.f32 %v162, %v460
  %v469 = vsub.f32 %v167, %v460
  %v470 = vsub.f32 %v172, %v460
  %v471 = vsub.f32 %v177, %v460
  %v472 = vsub.f32 %v182, %v460
  %v473 = vsub.f32 %v187, %v460
  %v474 = vsub.f32 %v192, %v460
  %v475 = vsub.f32 %v197, %v464
  %v476 = vsub.f32 %v202, %v464
  %v477 = vsub.f32 %v207, %v464
  %v478 = vsub.f32 %v212, %v464
  %v479 = vsub.f32 %v217, %v464
  %v480 = vsub.f32 %v222, %v464
  %v481 = vsub.f32 %v227, %v464
  %v482 = vsub.f32 %v232, %v464
  %v483 = vmul.f32 %v467, %v467
  %v484 = vmul.f32 %v468, %v468
  %v485 = vmul.f32 %v469, %v469
  %v486 = vmul.f32 %v470, %v470
  %v487 = vmul.f32 %v471, %v471
  %v488 = vmul.f32 %v472, %v472
  %v489 = vmul.f32 %v473, %v473
  %v490 = vmul.f32 %v474, %v474
  %v491 = vmul.f32 %v475, %v475
  %v492 = vmul.f32 %v476, %v476
  %v493 = vmul.f32 %v477, %v477
  %v494 = vmul.f32 %v478, %v478
  %v495 = vmul.f32 %v479, %v479
  %v496 = vmul.f32 %v480, %v480
  %v497 = vmul.f32 %v481, %v481
  %v498 = vmul.f32 %v482, %v482
  %v499 = vsel %vm241, %v483, 0.0
  %v500 = vsel %vm241, %v484, 0.0
  %v501 = vadd.f32 %v499, %v500
  %v502 = vsel %vm241, %v485, 0.0
  %v503 = vadd.f32 %v501, %v502
  %v504 = vsel %vm241, %v486, 0.0
  %v505 = vadd.f32 %v503, %v504
  %v506 = vsel %vm241, %v487, 0.0
  %v507 = vadd.f32 %v505, %v506
  %v508 = vsel %vm241, %v488, 0.0
  %v509 = vadd.f32 %v507, %v508
  %v510 = vsel %vm241, %v489, 0.0
  %v511 = vadd.f32 %v509, %v510
  %v512 = vsel %vm241, %v490, 0.0
  %v513 = vadd.f32 %v511, %v512
  %v514 = vrot.slane %v513, 4
  %v515 = vadd.f32 %v513, %v514
  %v516 = vrot.slane %v515, 2
  %v517 = vadd.f32 %v515, %v516
  %v518 = vrot.slane %v517, 1
  %v519 = vadd.f32 %v517, %v518
  %v520 = vsel %vm241, %v491, 0.0
  %v521 = vsel %vm241, %v492, 0.0
  %v522 = vadd.f32 %v520, %v521
  %v523 = vsel %vm241, %v493, 0.0
  %v524 = vadd.f32 %v522, %v523
  %v525 = vsel %vm241, %v494, 0.0
  %v526 = vadd.f32 %v524, %v525
  %v527 = vsel %vm241, %v495, 0.0
  %v528 = vadd.f32 %v526, %v527
  %v529 = vsel %vm241, %v496, 0.0
  %v530 = vadd.f32 %v528, %v529
  %v531 = vsel %vm241, %v497, 0.0
  %v532 = vadd.f32 %v530, %v531
  %v533 = vsel %vm241, %v498, 0.0
  %v534 = vadd.f32 %v532, %v533
  %v535 = vrot.slane %v534, 4
  %v536 = vadd.f32 %v534, %v535
  %v537 = vrot.slane %v536, 2
  %v538 = vadd.f32 %v536, %v537
  %v539 = vrot.slane %v538, 1
  %v540 = vadd.f32 %v538, %v539
  %v543 = vsel %vm286, %v540, %v519
  %v544 = vsel %vm241, %v543, 0
  %546 = vmatprep.subr.mxu0 0.0
  %547 = vmatpush1.msra.mxu0 %v235
  %548 = vmatprep.subr.mxu0 0.0
  %549 = vmatpush1.msra.mxu0 %v236
  %550 = vmatprep.subr.mxu0 0.0
  %551 = vmatpush1.msra.mxu0 %v237
  %552 = vmatprep.subr.mxu0 0.0
  %553 = vmatpush1.msra.mxu0 %v238
  %554 = vmatprep.subr.mxu0 0.0
  %555 = vmatpush1.msra.mxu0 0.0
  %556 = vmatprep.subr.mxu0 0.0
  %557 = vmatpush1.msra.mxu0 0.0
  %558 = vmatprep.subr.mxu0 0.0
  %559 = vmatpush1.msra.mxu0 0.0
  %560 = vmatprep.subr.mxu0 0.0
  %561 = vmatpush1.msra.mxu0 0.0
  %562 = vmatprep.subr.mxu0 0.0
  %563 = vmatpush1.msra.mxu0 0.0
  %564 = vmatprep.subr.mxu0 0.0
  %565 = vmatpush1.msra.mxu0 0.0
  %566 = vmatprep.subr.mxu0 0.0
  %567 = vmatpush1.msra.mxu0 0.0
  %568 = vmatprep.subr.mxu0 0.0
  %569 = vmatpush1.msra.mxu0 0.0
  %570 = vmatprep.subr.mxu0 0.0
  %571 = vmatpush1.msra.mxu0 0.0
  %572 = vmatprep.subr.mxu0 0.0
  %573 = vmatpush1.msra.mxu0 0.0
  %574 = vmatprep.subr.mxu0 0.0
  %575 = vmatpush1.msra.mxu0 0.0
  %576 = vmatprep.subr.mxu0 0.0
  %577 = vmatpush1.msra.mxu0 0.0
  %578 = vmatprep.subr.mxu0 0.0
  %579 = vmatpush1.msra.mxu0 0.0
  %580 = vmatprep.subr.mxu0 0.0
  %581 = vmatpush1.msra.mxu0 0.0
  %582 = vmatprep.subr.mxu0 0.0
  %583 = vmatpush1.msra.mxu0 0.0
  %584 = vmatprep.subr.mxu0 0.0
  %585 = vmatpush1.msra.mxu0 0.0
  %586 = vmatprep.subr.mxu0 0.0
  %587 = vmatpush1.msra.mxu0 0.0
  %588 = vmatprep.subr.mxu0 0.0
  %589 = vmatpush1.msra.mxu0 0.0
  %590 = vmatprep.subr.mxu0 0.0
  %591 = vmatpush1.msra.mxu0 0.0
  %592 = vmatprep.subr.mxu0 0.0
  %593 = vmatpush1.msra.mxu0 0.0
  %594 = vmatprep.subr.mxu0 0.0
  %595 = vmatpush1.msra.mxu0 0.0
  %596 = vmatprep.subr.mxu0 0.0
  %597 = vmatpush1.msra.mxu0 0.0
  %598 = vmatprep.subr.mxu0 0.0
  %599 = vmatpush1.msra.mxu0 0.0
  %600 = vmatprep.subr.mxu0 0.0
  %601 = vmatpush1.msra.mxu0 0.0
  %602 = vmatprep.subr.mxu0 0.0
  %603 = vmatpush1.msra.mxu0 0.0
  %604 = vmatprep.subr.mxu0 0.0
  %605 = vmatpush1.msra.mxu0 0.0
  %606 = vmatprep.subr.mxu0 0.0
  %607 = vmatpush1.msra.mxu0 0.0
  %608 = vmatprep.subr.mxu0 0.0
  %609 = vmatpush1.msra.mxu0 0.0
  %610 = vmatprep.mubr.f32.mxu0 0.0
  %611 = vmatmul.mubr.f32.gmra.mrb[0].mxu0 %v544
  %v612 = vpop.f32.mrb[0].mxu0
  %v613 = vadd.f32 0.0, %v612
  %v614 = vpop.f32.mrb[0].mxu0
  %615 = vdwg.mxu0
  %v616 = vmul.f32 %v613, 0.0078125
  %v618 = vsel %vm41, %v616, 0
  %620 = vmatprep.subr.mxu0 0.0
  %621 = vmatpush1.msra.mxu0 %v239
  %622 = vmatprep.subr.mxu0 0.0
  %623 = vmatpush1.msra.mxu0 %v240
  %624 = vmatprep.subr.mxu0 0.0
  %625 = vmatpush1.msra.mxu0 0.0
  %626 = vmatprep.subr.mxu0 0.0
  %627 = vmatpush1.msra.mxu0 0.0
  %628 = vmatprep.subr.mxu0 0.0
  %629 = vmatpush1.msra.mxu0 0.0
  %630 = vmatprep.subr.mxu0 0.0
  %631 = vmatpush1.msra.mxu0 0.0
  %632 = vmatprep.subr.mxu0 0.0
  %633 = vmatpush1.msra.mxu0 0.0
  %634 = vmatprep.subr.mxu0 0.0
  %635 = vmatpush1.msra.mxu0 0.0
  %636 = vmatprep.subr.mxu0 0.0
  %637 = vmatpush1.msra.mxu0 0.0
  %638 = vmatprep.subr.mxu0 0.0
  %639 = vmatpush1.msra.mxu0 0.0
  %640 = vmatprep.subr.mxu0 0.0
  %641 = vmatpush1.msra.mxu0 0.0
  %642 = vmatprep.subr.mxu0 0.0
  %643 = vmatpush1.msra.mxu0 0.0
  %644 = vmatprep.subr.mxu0 0.0
  %645 = vmatpush1.msra.mxu0 0.0
  %646 = vmatprep.subr.mxu0 0.0
  %647 = vmatpush1.msra.mxu0 0.0
  %648 = vmatprep.subr.mxu0 0.0
  %649 = vmatpush1.msra.mxu0 0.0
  %650 = vmatprep.subr.mxu0 0.0
  %651 = vmatpush1.msra.mxu0 0.0
  %652 = vmatprep.subr.mxu0 0.0
  %653 = vmatpush1.msra.mxu0 0.0
  %654 = vmatprep.subr.mxu0 0.0
  %655 = vmatpush1.msra.mxu0 0.0
  %656 = vmatprep.subr.mxu0 0.0
  %657 = vmatpush1.msra.mxu0 0.0
  %658 = vmatprep.subr.mxu0 0.0
  %659 = vmatpush1.msra.mxu0 0.0
  %660 = vmatprep.subr.mxu0 0.0
  %661 = vmatpush1.msra.mxu0 0.0
  %662 = vmatprep.subr.mxu0 0.0
  %663 = vmatpush1.msra.mxu0 0.0
  %664 = vmatprep.subr.mxu0 0.0
  %665 = vmatpush1.msra.mxu0 0.0
  %666 = vmatprep.subr.mxu0 0.0
  %667 = vmatpush1.msra.mxu0 0.0
  %668 = vmatprep.subr.mxu0 0.0
  %669 = vmatpush1.msra.mxu0 0.0
  %670 = vmatprep.subr.mxu0 0.0
  %671 = vmatpush1.msra.mxu0 0.0
  %672 = vmatprep.subr.mxu0 0.0
  %673 = vmatpush1.msra.mxu0 0.0
  %674 = vmatprep.subr.mxu0 0.0
  %675 = vmatpush1.msra.mxu0 0.0
  %676 = vmatprep.subr.mxu0 0.0
  %677 = vmatpush1.msra.mxu0 0.0
  %678 = vmatprep.subr.mxu0 0.0
  %679 = vmatpush1.msra.mxu0 0.0
  %680 = vmatprep.subr.mxu0 0.0
  %681 = vmatpush1.msra.mxu0 0.0
  %682 = vmatprep.subr.mxu0 0.0
  %683 = vmatpush1.msra.mxu0 0.0
  %684 = vmatprep.mubr.f32.mxu0 0.0
  %685 = vmatmul.mubr.f32.gmra.mrb[0].mxu0 %v618
  %v686 = vpop.f32.mrb[0].mxu0
  %v687 = vadd.f32 1e-05, %v686
  %v688 = vpop.f32.mrb[0].mxu0
  %689 = vdwg.mxu0
  %v690 = vrsqrt.pop %v687
  %v691 = vld [vmem:[%s2] sm:$0x1]
  %v692 = vld [vmem:[%s3] sm:$0x1]
  %v694 = vlaneseq
  %v695 = vshrl.u32 %v694, 7
  %v696 = vsub.s32 0, %v695
  %v697 = vrot.slane %v691, %v696
  %v699 = vmul.f32 %v690, %v697
  %v702 = vunpack.c.l.s4 1966171168
  %v703 = vunpack.c.0.s8 %v702
  %v704 = vlaneseq
  %v705 = vshrl.u32 %v704, 7
  %v706 = vsub.s32 %v703, %v705
  %v707 = vrot.slane %v699, %v706
  %v708 = vcombine.high %v707, %v707
  %v710 = vunpack.c.l.s4 1966171168
  %v711 = vunpack.c.0.s8 %v710
  %v712 = vlaneseq
  %v713 = vshrl.u32 %v712, 7
  %v714 = vsub.s32 %v711, %v713
  %v715 = vrot.slane %v707, %v714
  %v717 = vunpack.c.l.s4 1966171168
  %v718 = vunpack.c.0.s8 %v717
  %v719 = vlaneseq
  %v720 = vshrl.u32 %v719, 7
  %v721 = vsub.s32 %v718, %v720
  %v722 = vrot.slane %v708, %v721
  %v723 = vlaneseq
  %v724 = vshrl.u32 %v723, 7
  %v725 = vsub.s32 0, %v724
  %v726 = vrot.slane %v715, %v725
  %v727 = vlaneseq
  %v728 = vshrl.u32 %v727, 7
  %v729 = vsub.s32 0, %v728
  %v730 = vrot.slane %v722, %v729
  %v733 = vmul.f32 %v467, %v726
  %v734 = vmul.f32 %v468, %v726
  %v735 = vmul.f32 %v469, %v726
  %v736 = vmul.f32 %v470, %v726
  %v737 = vmul.f32 %v471, %v726
  %v738 = vmul.f32 %v472, %v726
  %v739 = vmul.f32 %v473, %v726
  %v740 = vmul.f32 %v474, %v726
  %v741 = vmul.f32 %v475, %v730
  %v742 = vmul.f32 %v476, %v730
  %v743 = vmul.f32 %v477, %v730
  %v744 = vmul.f32 %v478, %v730
  %v745 = vmul.f32 %v479, %v730
  %v746 = vmul.f32 %v480, %v730
  %v747 = vmul.f32 %v481, %v730
  %v748 = vmul.f32 %v482, %v730
  %v750 = vlaneseq
  %v751 = vshrl.u32 %v750, 7
  %v752 = vsub.s32 0, %v751
  %v753 = vrot.slane %v692, %v752
  %v755 = vadd.f32 %v733, %v753
  %v756 = vadd.f32 %v734, %v753
  %v757 = vadd.f32 %v735, %v753
  %v758 = vadd.f32 %v736, %v753
  %v759 = vadd.f32 %v737, %v753
  %v760 = vadd.f32 %v738, %v753
  %v761 = vadd.f32 %v739, %v753
  %v762 = vadd.f32 %v740, %v753
  %v763 = vadd.f32 %v741, %v753
  %v764 = vadd.f32 %v742, %v753
  %v765 = vadd.f32 %v743, %v753
  %v766 = vadd.f32 %v744, %v753
  %v767 = vadd.f32 %v745, %v753
  %v768 = vadd.f32 %v746, %v753
  %v769 = vadd.f32 %v747, %v753
  %v770 = vadd.f32 %v748, %v753
  %771 = vst.msk [vmem:[%s6] sm:$0xff] %vm241, %v755
  %772 = vst.msk [vmem:[%s6 + $0x8] sm:$0xff] %vm241, %v756
  %773 = vst.msk [vmem:[%s6 + $0x10] sm:$0xff] %vm241, %v757
  %774 = vst.msk [vmem:[%s6 + $0x18] sm:$0xff] %vm241, %v758
  %775 = vst.msk [vmem:[%s6 + $0x20] sm:$0xff] %vm241, %v759
  %776 = vst.msk [vmem:[%s6 + $0x28] sm:$0xff] %vm241, %v760
  %777 = vst.msk [vmem:[%s6 + $0x30] sm:$0xff] %vm241, %v761
  %778 = vst.msk [vmem:[%s6 + $0x38] sm:$0xff] %vm241, %v762
  %779 = vst.msk [vmem:[%s6 + $0x40] sm:$0xff] %vm241, %v763
  %780 = vst.msk [vmem:[%s6 + $0x48] sm:$0xff] %vm241, %v764
  %781 = vst.msk [vmem:[%s6 + $0x50] sm:$0xff] %vm241, %v765
  %782 = vst.msk [vmem:[%s6 + $0x58] sm:$0xff] %vm241, %v766
  %783 = vst.msk [vmem:[%s6 + $0x60] sm:$0xff] %vm241, %v767
  %784 = vst.msk [vmem:[%s6 + $0x68] sm:$0xff] %vm241, %v768
  %785 = vst.msk [vmem:[%s6 + $0x70] sm:$0xff] %vm241, %v769
  %786 = vst.msk [vmem:[%s6 + $0x78] sm:$0xff] %vm241, %v770
  // Predicated region
  $region26: #{tpu_custom_call.1} parent=0 // pred_check
    _
  $region27: #{tpu_custom_call.1} parent=0 // pred_check_branch
    %788 = sbr.rel (0) target = $region29
  $region28: #{tpu_custom_call.1} parent=0 // pred_region
    _
  $region29: #{tpu_custom_call.1} parent=0 // pred_fallthru
    _
  // Predicated region
  $region30: #{tpu_custom_call.1} parent=0 // pred_check
    _
  $region31: #{tpu_custom_call.1} parent=0 // pred_check_branch
    %790 = sbr.rel (0) target = $region33
  $region32: #{tpu_custom_call.1} parent=0 // pred_region
    _
  $region33: #{tpu_custom_call.1} parent=0 // pred_fallthru
    _

</llo_original>
